<compile_context>
chip_gen: v7x
topology: tpu7x:2x2x1
jax: 0.10.0
libtpu: 0.0.40
codegen_flags: <defaults>
</compile_context>

<pallas_src>
import functools

import jax
import jax.numpy as jnp
from jax.experimental import pallas as pl
from jax.experimental.pallas import tpu as pltpu

LANE = 128


def _round_up(x, m):
    return (x + m - 1) // m * m


def _tpu_config():
    """Per-generation (max_tile_m, vmem_limit_bytes)."""
    kind = ""
    try:
        kind = jax.devices()[0].device_kind.lower()
    except Exception:
        pass
    if "v7" in kind or "7x" in kind:
        return 512, 36 * 1024 * 1024        # 64 MiB physical VMEM: leave headroom
    if "v5" in kind or "v6" in kind:
        return 1024, 96 * 1024 * 1024       # 128 MiB physical VMEM: big tiles
    return 512, 40 * 1024 * 1024            # unknown: conservative


# ----------------------------------------------------------------------------
# Pass 1: tiled GEMM (bf16 x bf16 -> f32 MXU acc) + per-tile partial BN stats.
# Every grid step owns its own output blocks -> safe under "parallel" semantics.
# ----------------------------------------------------------------------------
def _gemm_stats_kernel(x_ref, w_ref, y_ref, psum_ref, psq_ref):
    y = jnp.dot(x_ref[...], w_ref[...], preferred_element_type=jnp.float32)
    y_ref[...] = y.astype(y_ref.dtype)
    # Per-tile partial statistics in f32 (padded rows are exact zeros -> add 0).
    # Group rows by sublane (8) so the partial-stat store stays (8,128)-aligned.
    g = y.reshape(-1, 8, y.shape[-1])
    psum_ref[...] = jnp.sum(g, axis=0)
    psq_ref[...] = jnp.sum(g * g, axis=0)


# ----------------------------------------------------------------------------
# Pass 2: y*scale + shift (+ residual) (+ ReLU), f32 math, tiled over M.
# ----------------------------------------------------------------------------
def _bn_res_relu_kernel(apply_relu, has_residual,
                        y_ref, scale_ref, shift_ref, *rest):
    if has_residual:
        r_ref, o_ref = rest
    else:
        (o_ref,) = rest
    y = y_ref[...].astype(jnp.float32) * scale_ref[...] + shift_ref[...]
    if has_residual:
        y = y + r_ref[...].astype(jnp.float32)
    if apply_relu:
        y = jnp.maximum(y, 0.0)
    o_ref[...] = y.astype(o_ref.dtype)


def conv_bn(patches, w_mat, gamma, beta, residual, *, apply_relu, m_true,
            out_dtype, eps, tile_m, vmem_limit):
    """conv-as-GEMM + BatchNorm(batch stats) + optional residual + optional ReLU.

    patches:    (Mp, Kp) bf16 im2col rows (rows beyond m_true are zeros)
    w_mat:      (Kp, Cp) bf16
    gamma/beta: (1, Cp)  f32
    residual:   (Mp, Cp) bf16 or None
    """
    Mp, Kp = patches.shape
    Cp = w_mat.shape[1]
    n_tiles = Mp // tile_m

    cost1 = pl.CostEstimate(
        flops=int(2 * Mp * Kp * Cp),
        transcendentals=0,
        bytes_accessed=int(Mp * Kp * 2 + n_tiles * Kp * Cp * 2
                           + Mp * Cp * 2 + 2 * n_tiles * 8 * Cp * 4))

    y, psum, psq = pl.pallas_call(
        _gemm_stats_kernel,
        out_shape=(jax.ShapeDtypeStruct((Mp, Cp), jnp.bfloat16),
                   jax.ShapeDtypeStruct((n_tiles * 8, Cp), jnp.float32),
                   jax.ShapeDtypeStruct((n_tiles * 8, Cp), jnp.float32)),
        grid=(n_tiles,),
        in_specs=[
            pl.BlockSpec((tile_m, Kp), lambda i: (i, 0)),
            # TODO(synk): pipeline_mode=pl.Buffered(1) on this grid-invariant
            # weight block would save Kp*Cp*2 bytes of VMEM once validated.
            pl.BlockSpec((Kp, Cp), lambda i: (0, 0)),
        ],
        out_specs=(
            pl.BlockSpec((tile_m, Cp), lambda i: (i, 0)),
            pl.BlockSpec((8, Cp), lambda i: (i, 0)),
            pl.BlockSpec((8, Cp), lambda i: (i, 0)),
        ),
        compiler_params=pltpu.CompilerParams(
            dimension_semantics=("parallel",),   # per-tile outputs -> race-free
            vmem_limit_bytes=vmem_limit),
        cost_estimate=cost1,
    )(patches, w_mat)

    # Finish BN statistics and fold into scale/shift: tiny (1, Cp) JAX ops.
    # NOTE: one-pass E[x^2]-E[x]^2 in f32; fine at these scales (values O(1)),
    # clamped at 0 to guard against cancellation.
    inv_m = 1.0 / float(m_true)
    ch_sum = jnp.sum(psum, axis=0).reshape(1, Cp)
    ch_sq = jnp.sum(psq, axis=0).reshape(1, Cp)
    mean = ch_sum * inv_m
    var = jnp.maximum(ch_sq * inv_m - mean * mean, 0.0)   # biased batch variance
    scale = gamma * jax.lax.rsqrt(var + eps)
    shift = beta - mean * scale

    kernel2 = functools.partial(_bn_res_relu_kernel, apply_relu,
                                residual is not None)
    inputs = [y, scale, shift]
    in_specs = [
        pl.BlockSpec((tile_m, Cp), lambda i: (i, 0)),
        pl.BlockSpec((1, Cp), lambda i: (0, 0)),
        pl.BlockSpec((1, Cp), lambda i: (0, 0)),
    ]
    out_itemsize = 4 if out_dtype == jnp.float32 else 2
    bytes2 = Mp * Cp * 2 + 2 * Cp * 4 + Mp * Cp * out_itemsize
    if residual is not None:
        inputs.append(residual)
        in_specs.append(pl.BlockSpec((tile_m, Cp), lambda i: (i, 0)))
        bytes2 += Mp * Cp * 2

    return pl.pallas_call(
        kernel2,
        out_shape=jax.ShapeDtypeStruct((Mp, Cp), out_dtype),
        grid=(n_tiles,),
        in_specs=in_specs,
        out_specs=pl.BlockSpec((tile_m, Cp), lambda i: (i, 0)),
        compiler_params=pltpu.CompilerParams(
            dimension_semantics=("parallel",),   # shards across both TCs on v7x
            vmem_limit_bytes=vmem_limit),
        cost_estimate=pl.CostEstimate(flops=int(4 * Mp * Cp), transcendentals=0,
                                      bytes_accessed=int(bytes2)),
    )(*inputs)


# ----------------------------------------------------------------------------
# Plain-JAX glue: im2col, weight reshape, zero padding (all inside one jit).
# ----------------------------------------------------------------------------
def im2col(x_nhwc, ksize, stride, padding):
    """(N, H, W, C) -> (N*Ho*Wo, ksize*ksize*C) patches, plus (Ho, Wo)."""
    N, H, W, C = x_nhwc.shape
    xp = jnp.pad(x_nhwc, ((0, 0), (padding, padding), (padding, padding), (0, 0)))
    Ho = (H + 2 * padding - ksize) // stride + 1
    Wo = (W + 2 * padding - ksize) // stride + 1
    taps = []
    for kh in range(ksize):
        for kw in range(ksize):
            taps.append(xp[:, kh:kh + stride * Ho:stride, kw:kw + stride * Wo:stride, :])
    p = jnp.stack(taps, axis=3)  # (N, Ho, Wo, ks*ks, C); K index = (kh*ks+kw)*C + cin
    return p.reshape(N * Ho * Wo, ksize * ksize * C), Ho, Wo
# TODO(synk): for large feature maps, fold the 9 conv taps into the GEMM kernel via
# spatially-tiled NHWC input blocks with a 1-pixel halo (manual DMA), so the 9x
# im2col expansion never round-trips HBM.


def conv_weight_to_gemm(w_oihw):
    """PyTorch (Cout, Cin, KH, KW) -> (KH*KW*Cin, Cout) matching im2col ordering."""
    Cout, Cin, KH, KW = w_oihw.shape
    return jnp.transpose(w_oihw, (2, 3, 1, 0)).reshape(KH * KW * Cin, Cout)


def _pad2d(a, rows, cols):
    return jnp.pad(a, ((0, rows - a.shape[0]), (0, cols - a.shape[1])))


# ----------------------------------------------------------------------------
# BasicBlock forward (semantics of the PyTorch module in training mode)
# ----------------------------------------------------------------------------
def basic_block_forward(x_nchw, params, stride, eps=1e-5):
    N, Cin, H, W = x_nchw.shape
    Cout = params["w1"].shape[0]
    Cp = _round_up(Cout, LANE)
    tile_m_max, vmem_limit = _tpu_config()

    # bf16 activations *before* im2col -> patch buffers are 2 bytes/elem.
    # TODO(synk): when stacking blocks, keep activations NHWC across the whole
    # model and transpose only at the model boundary (kept here to match NCHW spec).
    x_nhwc = jnp.transpose(x_nchw, (0, 2, 3, 1)).astype(jnp.bfloat16)

    p1, Ho, Wo = im2col(x_nhwc, 3, stride, 1)
    M = N * Ho * Wo
    tile_m = min(tile_m_max, _round_up(M, 8))
    Mp = _round_up(M, tile_m)

    def prep_patches(p):
        Kp = _round_up(p.shape[1], LANE)
        return _pad2d(p, Mp, Kp), Kp          # already bf16

    def prep_weight(w, Kp):
        return _pad2d(conv_weight_to_gemm(w), Kp, Cp).astype(jnp.bfloat16)

    def prep_vec(v):
        return _pad2d(v.astype(jnp.float32), 1, Cp)

    run = functools.partial(conv_bn, m_true=M, eps=eps, tile_m=tile_m,
                            vmem_limit=vmem_limit)

    # conv1 (3x3 / stride) + bn1 + ReLU -> bf16 (feeds conv2's im2col)
    p1b, K1p = prep_patches(p1)
    y1 = run(p1b, prep_weight(params["w1"], K1p),
             prep_vec(params["g1"]), prep_vec(params["b1"]),
             None, apply_relu=True, out_dtype=jnp.bfloat16)
    y1_nhwc = y1[:M, :Cout].reshape(N, Ho, Wo, Cout)

    # shortcut: 1x1 conv + BN when shape changes, identity otherwise (bf16 buffer)
    if stride != 1 or Cin != Cout:
        ps, _, _ = im2col(x_nhwc, 1, stride, 0)
        psb, Ksp = prep_patches(ps)
        sc = run(psb, prep_weight(params["ws"], Ksp),
                 prep_vec(params["gs"]), prep_vec(params["bs"]),
                 None, apply_relu=False, out_dtype=jnp.bfloat16)
    else:
        sc = _pad2d(x_nhwc.reshape(M, Cout), Mp, Cp)

    # conv2 (3x3 / 1) + bn2 + residual add + ReLU -> f32 final output
    p2, _, _ = im2col(y1_nhwc, 3, 1, 1)
    p2b, K2p = prep_patches(p2)
    y2 = run(p2b, prep_weight(params["w2"], K2p),
             prep_vec(params["g2"]), prep_vec(params["b2"]),
             sc, apply_relu=True, out_dtype=jnp.float32)

    out_nhwc = y2[:M, :Cout].reshape(N, Ho, Wo, Cout)
    return jnp.transpose(out_nhwc, (0, 3, 1, 2))


def init_params(key, in_channels, out_channels, stride):
    ks = jax.random.split(key, 9)
    p = {
        "w1": 0.1 * jax.random.normal(ks[0], (out_channels, in_channels, 3, 3), jnp.float32),
        "g1": 1.0 + 0.05 * jax.random.normal(ks[1], (1, out_channels), jnp.float32),
        "b1": 0.05 * jax.random.normal(ks[2], (1, out_channels), jnp.float32),
        "w2": 0.1 * jax.random.normal(ks[3], (out_channels, out_channels, 3, 3), jnp.float32),
        "g2": 1.0 + 0.05 * jax.random.normal(ks[4], (1, out_channels), jnp.float32),
        "b2": 0.05 * jax.random.normal(ks[5], (1, out_channels), jnp.float32),
    }
    if stride != 1 or in_channels != out_channels:
        p["ws"] = 0.1 * jax.random.normal(ks[6], (out_channels, in_channels, 1, 1), jnp.float32)
        p["gs"] = 1.0 + 0.05 * jax.random.normal(ks[7], (1, out_channels), jnp.float32)
        p["bs"] = 0.05 * jax.random.normal(ks[8], (1, out_channels), jnp.float32)
    return p


# Pure-JAX f32 reference (matches PyTorch training-mode BasicBlock) for validation.
def reference_forward(x_nchw, params, stride, eps=1e-5):
    def conv(x, w, s, p):
        return jax.lax.conv_general_dilated(
            x, w, window_strides=(s, s), padding=((p, p), (p, p)),
            dimension_numbers=("NCHW", "OIHW", "NCHW"))

    def bn(x, g, b):
        mean = jnp.mean(x, axis=(0, 2, 3), keepdims=True)
        var = jnp.mean((x - mean) ** 2, axis=(0, 2, 3), keepdims=True)
        return ((x - mean) * jax.lax.rsqrt(var + eps)
                * g.reshape(1, -1, 1, 1) + b.reshape(1, -1, 1, 1))

    out = jax.nn.relu(bn(conv(x_nchw, params["w1"], stride, 1),
                         params["g1"], params["b1"]))
    out = bn(conv(out, params["w2"], 1, 1), params["g2"], params["b2"])
    if "ws" in params:
        sc = bn(conv(x_nchw, params["ws"], stride, 0), params["gs"], params["bs"])
    else:
        sc = x_nchw
    return jax.nn.relu(out + sc)


if __name__ == "__main__":
    key = jax.random.PRNGKey(0)
    k_x, k_p = jax.random.split(key)

    N, Cin, H, W = 2, 4, 16, 16
    Cout, stride = 8, 2   # exercises the conv1x1 + BN shortcut branch

    x = jax.random.normal(k_x, (N, Cin, H, W), jnp.float32)   # PyTorch NCHW input
    params = init_params(k_p, Cin, Cout, stride)

    fwd = jax.jit(lambda xx, pp: basic_block_forward(xx, pp, stride))
    out = fwd(x, params)
    jax.block_until_ready(out)
    assert out.shape == (N, Cout, H // stride, W // stride)

    ref = reference_forward(x, params, stride)
    err = float(jnp.max(jnp.abs(out - ref)))
    # bf16 MXU inputs + bf16 inter-pass activations vs. an all-f32 reference:
    # expect ~1% relative error on O(1) BN-normalized values.
    assert err < 2e-1, f"max abs error vs f32 reference too large: {err}"
    print("KERNEL_OK")
</pallas_src>

<mosaic_0001>
module attributes {stable_mosaic.version = 11 : i64} {
  func.func @_bn_res_relu_kernel(%arg0: i32, %arg1: memref<128x128xbf16, #tpu.memory_space<vmem>>, %arg2: memref<1x128xf32, #tpu.memory_space<vmem>>, %arg3: memref<1x128xf32, #tpu.memory_space<vmem>>, %arg4: memref<128x128xbf16, #tpu.memory_space<vmem>>) attributes {dimension_semantics = [#tpu.dimension_semantics<parallel>], iteration_bounds = array<i64: 1>, scalar_prefetch = 0 : i64, scratch_operands = 0 : i64, tpu.core_type = #tpu.core_type<tc>, window_params = [{transform_indices = @transform_0, window_bounds = array<i64: 128, 128>}, {pipeline_mode = #tpu.pipeline_mode<synchronous>, transform_indices = @transform_1, window_bounds = array<i64: 1, 128>}, {pipeline_mode = #tpu.pipeline_mode<synchronous>, transform_indices = @transform_2, window_bounds = array<i64: 1, 128>}, {transform_indices = @transform_3, window_bounds = array<i64: 128, 128>}]} {
    %c0 = arith.constant 0 : index
    %c0_0 = arith.constant 0 : index
    %0 = vector.load %arg1[%c0, %c0_0] : memref<128x128xbf16, #tpu.memory_space<vmem>>, vector<128x128xbf16>
    %1 = arith.extf %0 : vector<128x128xbf16> to vector<128x128xf32>
    %c0_1 = arith.constant 0 : index
    %c0_2 = arith.constant 0 : index
    %2 = vector.load %arg2[%c0_1, %c0_2] : memref<1x128xf32, #tpu.memory_space<vmem>>, vector<1x128xf32>
    %3 = vector.broadcast %2 : vector<1x128xf32> to vector<128x128xf32>
    %4 = arith.mulf %1, %3 : vector<128x128xf32>
    %c0_3 = arith.constant 0 : index
    %c0_4 = arith.constant 0 : index
    %5 = vector.load %arg3[%c0_3, %c0_4] : memref<1x128xf32, #tpu.memory_space<vmem>>, vector<1x128xf32>
    %6 = vector.broadcast %5 : vector<1x128xf32> to vector<128x128xf32>
    %7 = arith.addf %4, %6 : vector<128x128xf32>
    %cst = arith.constant 0.000000e+00 : f32
    %8 = vector.broadcast %cst : f32 to vector<128x128xf32>
    %9 = arith.maximumf %7, %8 : vector<128x128xf32>
    %10 = arith.truncf %9 : vector<128x128xf32> to vector<128x128xbf16>
    %c0_5 = arith.constant 0 : index
    %c0_6 = arith.constant 0 : index
    %11 = vector.load %arg4[%c0_5, %c0_6] : memref<128x128xbf16, #tpu.memory_space<vmem>>, vector<128x128xbf16>
    tpu.vector_store %arg4[%c0_5, %c0_6], %10 {strides = array<i32>} : memref<128x128xbf16, #tpu.memory_space<vmem>>, vector<128x128xbf16>,
    return
  }
  func.func @transform_0(%arg0: i32) -> (i32, i32) {
    %c0_i32 = arith.constant 0 : i32
    %c0_i32_0 = arith.constant 0 : i32
    return %arg0, %c0_i32 : i32, i32
  }
  func.func @transform_1(%arg0: i32) -> (i32, i32) {
    %c0_i32 = arith.constant 0 : i32
    %c0_i32_0 = arith.constant 0 : i32
    %c0_i32_1 = arith.constant 0 : i32
    return %c0_i32, %c0_i32_0 : i32, i32
  }
  func.func @transform_2(%arg0: i32) -> (i32, i32) {
    %c0_i32 = arith.constant 0 : i32
    %c0_i32_0 = arith.constant 0 : i32
    %c0_i32_1 = arith.constant 0 : i32
    return %c0_i32, %c0_i32_0 : i32, i32
  }
  func.func @transform_3(%arg0: i32) -> (i32, i32) {
    %c0_i32 = arith.constant 0 : i32
    %c0_i32_0 = arith.constant 0 : i32
    return %arg0, %c0_i32 : i32, i32
  }
}

module attributes {stable_mosaic.version = 11 : i64} {
  func.func @_gemm_stats_kernel(%arg0: i32, %arg1: memref<128x128xbf16, #tpu.memory_space<vmem>>, %arg2: memref<128x128xbf16, #tpu.memory_space<vmem>>, %arg3: memref<128x128xbf16, #tpu.memory_space<vmem>>, %arg4: memref<8x128xf32, #tpu.memory_space<vmem>>, %arg5: memref<8x128xf32, #tpu.memory_space<vmem>>) attributes {dimension_semantics = [#tpu.dimension_semantics<parallel>], iteration_bounds = array<i64: 1>, scalar_prefetch = 0 : i64, scratch_operands = 0 : i64, tpu.core_type = #tpu.core_type<tc>, window_params = [{transform_indices = @transform_0, window_bounds = array<i64: 128, 128>}, {pipeline_mode = #tpu.pipeline_mode<synchronous>, transform_indices = @transform_1, window_bounds = array<i64: 128, 128>}, {transform_indices = @transform_2, window_bounds = array<i64: 128, 128>}, {transform_indices = @transform_3, window_bounds = array<i64: 8, 128>}, {transform_indices = @transform_4, window_bounds = array<i64: 8, 128>}]} {
    %c0 = arith.constant 0 : index
    %c0_0 = arith.constant 0 : index
    %0 = vector.load %arg1[%c0, %c0_0] : memref<128x128xbf16, #tpu.memory_space<vmem>>, vector<128x128xbf16>
    %c0_1 = arith.constant 0 : index
    %c0_2 = arith.constant 0 : index
    %1 = vector.load %arg2[%c0_1, %c0_2] : memref<128x128xbf16, #tpu.memory_space<vmem>>, vector<128x128xbf16>
    %cst = arith.constant dense<0.000000e+00> : vector<128x128xf32>
    %2 = tpu.matmul %0, %1, %cst {dimension_numbers = #tpu.dot_dimension_numbers<[1], [0], [0], [1], [0, 0, 1, 1], [], []>} : vector<128x128xbf16>, vector<128x128xbf16>, vector<128x128xf32> -> vector<128x128xf32>
    %3 = arith.truncf %2 : vector<128x128xf32> to vector<128x128xbf16>
    %c0_3 = arith.constant 0 : index
    %c0_4 = arith.constant 0 : index
    %4 = vector.load %arg3[%c0_3, %c0_4] : memref<128x128xbf16, #tpu.memory_space<vmem>>, vector<128x128xbf16>
    tpu.vector_store %arg3[%c0_3, %c0_4], %3 {strides = array<i32>} : memref<128x128xbf16, #tpu.memory_space<vmem>>, vector<128x128xbf16>,
    %5 = vector.shape_cast %2 : vector<128x128xf32> to vector<16x8x128xf32>
    %cst_5 = arith.constant dense<0.000000e+00> : vector<8x128xf32>
    %6 = vector.multi_reduction <add>, %5, %cst_5 [0] : vector<16x8x128xf32> to vector<8x128xf32>
    %c0_6 = arith.constant 0 : index
    %c0_7 = arith.constant 0 : index
    %7 = vector.load %arg4[%c0_6, %c0_7] : memref<8x128xf32, #tpu.memory_space<vmem>>, vector<8x128xf32>
    tpu.vector_store %arg4[%c0_6, %c0_7], %6 {strides = array<i32>} : memref<8x128xf32, #tpu.memory_space<vmem>>, vector<8x128xf32>,
    %8 = arith.mulf %5, %5 : vector<16x8x128xf32>
    %cst_8 = arith.constant dense<0.000000e+00> : vector<8x128xf32>
    %9 = vector.multi_reduction <add>, %8, %cst_8 [0] : vector<16x8x128xf32> to vector<8x128xf32>
    %c0_9 = arith.constant 0 : index
    %c0_10 = arith.constant 0 : index
    %10 = vector.load %arg5[%c0_9, %c0_10] : memref<8x128xf32, #tpu.memory_space<vmem>>, vector<8x128xf32>
    tpu.vector_store %arg5[%c0_9, %c0_10], %9 {strides = array<i32>} : memref<8x128xf32, #tpu.memory_space<vmem>>, vector<8x128xf32>,
    return
  }
  func.func @transform_0(%arg0: i32) -> (i32, i32) {
    %c0_i32 = arith.constant 0 : i32
    %c0_i32_0 = arith.constant 0 : i32
    return %arg0, %c0_i32 : i32, i32
  }
  func.func @transform_1(%arg0: i32) -> (i32, i32) {
    %c0_i32 = arith.constant 0 : i32
    %c0_i32_0 = arith.constant 0 : i32
    %c0_i32_1 = arith.constant 0 : i32
    return %c0_i32, %c0_i32_0 : i32, i32
  }
  func.func @transform_2(%arg0: i32) -> (i32, i32) {
    %c0_i32 = arith.constant 0 : i32
    %c0_i32_0 = arith.constant 0 : i32
    return %arg0, %c0_i32 : i32, i32
  }
  func.func @transform_3(%arg0: i32) -> (i32, i32) {
    %c0_i32 = arith.constant 0 : i32
    %c0_i32_0 = arith.constant 0 : i32
    return %arg0, %c0_i32 : i32, i32
  }
  func.func @transform_4(%arg0: i32) -> (i32, i32) {
    %c0_i32 = arith.constant 0 : i32
    %c0_i32_0 = arith.constant 0 : i32
    return %arg0, %c0_i32 : i32, i32
  }
}

module attributes {stable_mosaic.version = 11 : i64} {
  func.func @_bn_res_relu_kernel(%arg0: i32, %arg1: memref<128x128xbf16, #tpu.memory_space<vmem>>, %arg2: memref<1x128xf32, #tpu.memory_space<vmem>>, %arg3: memref<1x128xf32, #tpu.memory_space<vmem>>, %arg4: memref<128x128xbf16, #tpu.memory_space<vmem>>, %arg5: memref<128x128xf32, #tpu.memory_space<vmem>>) attributes {dimension_semantics = [#tpu.dimension_semantics<parallel>], iteration_bounds = array<i64: 1>, scalar_prefetch = 0 : i64, scratch_operands = 0 : i64, tpu.core_type = #tpu.core_type<tc>, window_params = [{transform_indices = @transform_0, window_bounds = array<i64: 128, 128>}, {pipeline_mode = #tpu.pipeline_mode<synchronous>, transform_indices = @transform_1, window_bounds = array<i64: 1, 128>}, {pipeline_mode = #tpu.pipeline_mode<synchronous>, transform_indices = @transform_2, window_bounds = array<i64: 1, 128>}, {transform_indices = @transform_3, window_bounds = array<i64: 128, 128>}, {transform_indices = @transform_4, window_bounds = array<i64: 128, 128>}]} {
    %c0 = arith.constant 0 : index
    %c0_0 = arith.constant 0 : index
    %0 = vector.load %arg1[%c0, %c0_0] : memref<128x128xbf16, #tpu.memory_space<vmem>>, vector<128x128xbf16>
    %1 = arith.extf %0 : vector<128x128xbf16> to vector<128x128xf32>
    %c0_1 = arith.constant 0 : index
    %c0_2 = arith.constant 0 : index
    %2 = vector.load %arg2[%c0_1, %c0_2] : memref<1x128xf32, #tpu.memory_space<vmem>>, vector<1x128xf32>
    %3 = vector.broadcast %2 : vector<1x128xf32> to vector<128x128xf32>
    %4 = arith.mulf %1, %3 : vector<128x128xf32>
    %c0_3 = arith.constant 0 : index
    %c0_4 = arith.constant 0 : index
    %5 = vector.load %arg3[%c0_3, %c0_4] : memref<1x128xf32, #tpu.memory_space<vmem>>, vector<1x128xf32>
    %6 = vector.broadcast %5 : vector<1x128xf32> to vector<128x128xf32>
    %7 = arith.addf %4, %6 : vector<128x128xf32>
    %c0_5 = arith.constant 0 : index
    %c0_6 = arith.constant 0 : index
    %8 = vector.load %arg4[%c0_5, %c0_6] : memref<128x128xbf16, #tpu.memory_space<vmem>>, vector<128x128xbf16>
    %9 = arith.extf %8 : vector<128x128xbf16> to vector<128x128xf32>
    %10 = arith.addf %7, %9 : vector<128x128xf32>
    %cst = arith.constant 0.000000e+00 : f32
    %11 = vector.broadcast %cst : f32 to vector<128x128xf32>
    %12 = arith.maximumf %10, %11 : vector<128x128xf32>
    %c0_7 = arith.constant 0 : index
    %c0_8 = arith.constant 0 : index
    %13 = vector.load %arg5[%c0_7, %c0_8] : memref<128x128xf32, #tpu.memory_space<vmem>>, vector<128x128xf32>
    tpu.vector_store %arg5[%c0_7, %c0_8], %12 {strides = array<i32>} : memref<128x128xf32, #tpu.memory_space<vmem>>, vector<128x128xf32>,
    return
  }
  func.func @transform_0(%arg0: i32) -> (i32, i32) {
    %c0_i32 = arith.constant 0 : i32
    %c0_i32_0 = arith.constant 0 : i32
    return %arg0, %c0_i32 : i32, i32
  }
  func.func @transform_1(%arg0: i32) -> (i32, i32) {
    %c0_i32 = arith.constant 0 : i32
    %c0_i32_0 = arith.constant 0 : i32
    %c0_i32_1 = arith.constant 0 : i32
    return %c0_i32, %c0_i32_0 : i32, i32
  }
  func.func @transform_2(%arg0: i32) -> (i32, i32) {
    %c0_i32 = arith.constant 0 : i32
    %c0_i32_0 = arith.constant 0 : i32
    %c0_i32_1 = arith.constant 0 : i32
    return %c0_i32, %c0_i32_0 : i32, i32
  }
  func.func @transform_3(%arg0: i32) -> (i32, i32) {
    %c0_i32 = arith.constant 0 : i32
    %c0_i32_0 = arith.constant 0 : i32
    return %arg0, %c0_i32 : i32, i32
  }
  func.func @transform_4(%arg0: i32) -> (i32, i32) {
    %c0_i32 = arith.constant 0 : i32
    %c0_i32_0 = arith.constant 0 : i32
    return %arg0, %c0_i32 : i32, i32
  }
}

module attributes {stable_mosaic.version = 11 : i64} {
  func.func @_bn_res_relu_kernel(%arg0: i32, %arg1: memref<128x128xbf16, #tpu.memory_space<vmem>>, %arg2: memref<1x128xf32, #tpu.memory_space<vmem>>, %arg3: memref<1x128xf32, #tpu.memory_space<vmem>>, %arg4: memref<128x128xbf16, #tpu.memory_space<vmem>>) attributes {dimension_semantics = [#tpu.dimension_semantics<parallel>], iteration_bounds = array<i64: 1>, scalar_prefetch = 0 : i64, scratch_operands = 0 : i64, tpu.core_type = #tpu.core_type<tc>, window_params = [{transform_indices = @transform_0, window_bounds = array<i64: 128, 128>}, {pipeline_mode = #tpu.pipeline_mode<synchronous>, transform_indices = @transform_1, window_bounds = array<i64: 1, 128>}, {pipeline_mode = #tpu.pipeline_mode<synchronous>, transform_indices = @transform_2, window_bounds = array<i64: 1, 128>}, {transform_indices = @transform_3, window_bounds = array<i64: 128, 128>}]} {
    %c0 = arith.constant 0 : index
    %c0_0 = arith.constant 0 : index
    %0 = vector.load %arg1[%c0, %c0_0] : memref<128x128xbf16, #tpu.memory_space<vmem>>, vector<128x128xbf16>
    %1 = arith.extf %0 : vector<128x128xbf16> to vector<128x128xf32>
    %c0_1 = arith.constant 0 : index
    %c0_2 = arith.constant 0 : index
    %2 = vector.load %arg2[%c0_1, %c0_2] : memref<1x128xf32, #tpu.memory_space<vmem>>, vector<1x128xf32>
    %3 = vector.broadcast %2 : vector<1x128xf32> to vector<128x128xf32>
    %4 = arith.mulf %1, %3 : vector<128x128xf32>
    %c0_3 = arith.constant 0 : index
    %c0_4 = arith.constant 0 : index
    %5 = vector.load %arg3[%c0_3, %c0_4] : memref<1x128xf32, #tpu.memory_space<vmem>>, vector<1x128xf32>
    %6 = vector.broadcast %5 : vector<1x128xf32> to vector<128x128xf32>
    %7 = arith.addf %4, %6 : vector<128x128xf32>
    %8 = arith.truncf %7 : vector<128x128xf32> to vector<128x128xbf16>
    %c0_5 = arith.constant 0 : index
    %c0_6 = arith.constant 0 : index
    %9 = vector.load %arg4[%c0_5, %c0_6] : memref<128x128xbf16, #tpu.memory_space<vmem>>, vector<128x128xbf16>
    tpu.vector_store %arg4[%c0_5, %c0_6], %8 {strides = array<i32>} : memref<128x128xbf16, #tpu.memory_space<vmem>>, vector<128x128xbf16>,
    return
  }
  func.func @transform_0(%arg0: i32) -> (i32, i32) {
    %c0_i32 = arith.constant 0 : i32
    %c0_i32_0 = arith.constant 0 : i32
    return %arg0, %c0_i32 : i32, i32
  }
  func.func @transform_1(%arg0: i32) -> (i32, i32) {
    %c0_i32 = arith.constant 0 : i32
    %c0_i32_0 = arith.constant 0 : i32
    %c0_i32_1 = arith.constant 0 : i32
    return %c0_i32, %c0_i32_0 : i32, i32
  }
  func.func @transform_2(%arg0: i32) -> (i32, i32) {
    %c0_i32 = arith.constant 0 : i32
    %c0_i32_0 = arith.constant 0 : i32
    %c0_i32_1 = arith.constant 0 : i32
    return %c0_i32, %c0_i32_0 : i32, i32
  }
  func.func @transform_3(%arg0: i32) -> (i32, i32) {
    %c0_i32 = arith.constant 0 : i32
    %c0_i32_0 = arith.constant 0 : i32
    return %arg0, %c0_i32 : i32, i32
  }
}

</mosaic_0001>

<llo_original>
// kernel: _lambda_.7
$region0: #{_lambda_.7}
  #allocation0 [shape = 'u32[]', space=smem, size = 0x4, offset = 0x4, fixed_abs, tag = 'smem constant byte address 0x4 - core index']
  #allocation1 [shape = 'u32[144,128]{1,0:T(1,128)}', space=vmem, size = 0x12000, scoped, tag = 'internal scratch']
  %s0 = inlined_call_operand.vmem [shape: bf16[128,128], index: 0, kind: input, shape index: {}]
  %s1 = inlined_call_operand.vmem [shape: f32[1,128], index: 1, kind: input, shape index: {}]
  %s2 = inlined_call_operand.vmem [shape: f32[1,128], index: 2, kind: input, shape index: {}]
  %s3 = inlined_call_operand.vmem [shape: bf16[128,128], index: 3, kind: output, shape index: {}]
  %s4 = sld [smem:[#allocation0]]
  $region22: #{_lambda_.7} parent=0
    _
  %s6 = ssub.s32 1, %s4
  %s7 = scalar_select 0, %s6, %s4
  // Predicated region
  $region2: #{_lambda_.7} parent=0 // pred_check
    _
  $region3: #{_lambda_.7} parent=0 // pred_check_branch
    %9 = sbr.rel (0) target = $region5
  $region4: #{_lambda_.7} parent=0 // pred_region
    _
  $region5: #{_lambda_.7} parent=0 // pred_fallthru
    _
  // Predicated region
  $region6: #{_lambda_.7} parent=0 // pred_check
    _
  $region7: #{_lambda_.7} parent=0 // pred_check_branch
    %11 = sbr.rel (0) target = $region9
  $region8: #{_lambda_.7} parent=0 // pred_region
    _
  $region9: #{_lambda_.7} parent=0 // pred_fallthru
    _
  // Predicated region
  $region10: #{_lambda_.7} parent=0 // pred_check
    _
  $region11: #{_lambda_.7} parent=0 // pred_check_branch
    %13 = sbr.rel (0) target = $region13
  $region12: #{_lambda_.7} parent=0 // pred_region
    _
  $region13: #{_lambda_.7} parent=0 // pred_fallthru
    _
  %v14 = vld [vmem:[%s0] sm:$0xf]
  %v15 = vld [vmem:[%s0 + $0x4] sm:$0xf]
  %v16 = vld [vmem:[%s0 + $0x8] sm:$0xf]
  %v17 = vld [vmem:[%s0 + $0xc] sm:$0xf]
  %v18 = vld [vmem:[%s0 + $0x10] sm:$0xf]
  %v19 = vld [vmem:[%s0 + $0x14] sm:$0xf]
  %v20 = vld [vmem:[%s0 + $0x18] sm:$0xf]
  %v21 = vld [vmem:[%s0 + $0x1c] sm:$0xf]
  %v22 = vld [vmem:[%s0 + $0x20] sm:$0xf]
  %v23 = vld [vmem:[%s0 + $0x24] sm:$0xf]
  %v24 = vld [vmem:[%s0 + $0x28] sm:$0xf]
  %v25 = vld [vmem:[%s0 + $0x2c] sm:$0xf]
  %v26 = vld [vmem:[%s0 + $0x30] sm:$0xf]
  %v27 = vld [vmem:[%s0 + $0x34] sm:$0xf]
  %v28 = vld [vmem:[%s0 + $0x38] sm:$0xf]
  %v29 = vld [vmem:[%s0 + $0x3c] sm:$0xf]
  %v30 = vunpack.c.l.bf16 %v14
  %v31 = vunpack.c.l.bf16 %v15
  %v32 = vunpack.c.l.bf16 %v16
  %v33 = vunpack.c.l.bf16 %v17
  %v34 = vunpack.c.l.bf16 %v18
  %v35 = vunpack.c.l.bf16 %v19
  %v36 = vunpack.c.l.bf16 %v20
  %v37 = vunpack.c.l.bf16 %v21
  %v38 = vunpack.c.l.bf16 %v22
  %v39 = vunpack.c.l.bf16 %v23
  %v40 = vunpack.c.l.bf16 %v24
  %v41 = vunpack.c.l.bf16 %v25
  %v42 = vunpack.c.l.bf16 %v26
  %v43 = vunpack.c.l.bf16 %v27
  %v44 = vunpack.c.l.bf16 %v28
  %v45 = vunpack.c.l.bf16 %v29
  %v46 = vld [vmem:[%s1] sm:$0x1]
  %v48 = vlaneseq
  %v49 = vshrl.u32 %v48, 7
  %v50 = vsub.s32 0, %v49
  %v51 = vrot.slane %v46, %v50
  %v53 = vmul.f32 %v30, %v51
  %v54 = vmul.f32 %v31, %v51
  %v55 = vmul.f32 %v32, %v51
  %v56 = vmul.f32 %v33, %v51
  %v57 = vmul.f32 %v34, %v51
  %v58 = vmul.f32 %v35, %v51
  %v59 = vmul.f32 %v36, %v51
  %v60 = vmul.f32 %v37, %v51
  %v61 = vmul.f32 %v38, %v51
  %v62 = vmul.f32 %v39, %v51
  %v63 = vmul.f32 %v40, %v51
  %v64 = vmul.f32 %v41, %v51
  %v65 = vmul.f32 %v42, %v51
  %v66 = vmul.f32 %v43, %v51
  %v67 = vmul.f32 %v44, %v51
  %v68 = vmul.f32 %v45, %v51
  %v69 = vld [vmem:[%s2] sm:$0x1]
  %v71 = vlaneseq
  %v72 = vshrl.u32 %v71, 7
  %v73 = vsub.s32 0, %v72
  %v74 = vrot.slane %v69, %v73
  %v76 = vadd.f32 %v53, %v74
  %v77 = vadd.f32 %v54, %v74
  %v78 = vadd.f32 %v55, %v74
  %v79 = vadd.f32 %v56, %v74
  %v80 = vadd.f32 %v57, %v74
  %v81 = vadd.f32 %v58, %v74
  %v82 = vadd.f32 %v59, %v74
  %v83 = vadd.f32 %v60, %v74
  %v84 = vadd.f32 %v61, %v74
  %v85 = vadd.f32 %v62, %v74
  %v86 = vadd.f32 %v63, %v74
  %v87 = vadd.f32 %v64, %v74
  %v88 = vadd.f32 %v65, %v74
  %v89 = vadd.f32 %v66, %v74
  %v90 = vadd.f32 %v67, %v74
  %v91 = vadd.f32 %v68, %v74
  %v92 = vmax.f32 %v76, 0.0
  %v93 = vmax.f32 %v77, 0.0
  %v94 = vmax.f32 %v78, 0.0
  %v95 = vmax.f32 %v79, 0.0
  %v96 = vmax.f32 %v80, 0.0
  %v97 = vmax.f32 %v81, 0.0
  %v98 = vmax.f32 %v82, 0.0
  %v99 = vmax.f32 %v83, 0.0
  %v100 = vmax.f32 %v84, 0.0
  %v101 = vmax.f32 %v85, 0.0
  %v102 = vmax.f32 %v86, 0.0
  %v103 = vmax.f32 %v87, 0.0
  %v104 = vmax.f32 %v88, 0.0
  %v105 = vmax.f32 %v89, 0.0
  %v106 = vmax.f32 %v90, 0.0
  %v107 = vmax.f32 %v91, 0.0
  %v108 = vpack.c.bf16 %v93, %v92
  %v109 = vpack.c.bf16 %v95, %v94
  %v110 = vpack.c.bf16 %v97, %v96
  %v111 = vpack.c.bf16 %v99, %v98
  %v112 = vpack.c.bf16 %v101, %v100
  %v113 = vpack.c.bf16 %v103, %v102
  %v114 = vpack.c.bf16 %v105, %v104
  %v115 = vpack.c.bf16 %v107, %v106
  %v124 = vunpack.c.l.b16 %v108
  %v125 = vunpack.c.h.b16 %v108
  %v126 = vunpack.c.l.b16 %v109
  %v127 = vunpack.c.h.b16 %v109
  %v128 = vunpack.c.l.b16 %v110
  %v129 = vunpack.c.h.b16 %v110
  %v130 = vunpack.c.l.b16 %v111
  %v131 = vunpack.c.h.b16 %v111
  %v132 = vunpack.c.l.b16 %v112
  %v133 = vunpack.c.h.b16 %v112
  %v134 = vunpack.c.l.b16 %v113
  %v135 = vunpack.c.h.b16 %v113
  %v136 = vunpack.c.l.b16 %v114
  %v137 = vunpack.c.h.b16 %v114
  %v138 = vunpack.c.l.b16 %v115
  %v139 = vunpack.c.h.b16 %v115
  %v140 = vpack.c.b16 %v124, %v124
  %v141 = vpack.c.b16 %v125, %v125
  %v142 = vpack.c.b16 %v126, %v126
  %v143 = vpack.c.b16 %v127, %v127
  %v144 = vpack.c.b16 %v128, %v128
  %v145 = vpack.c.b16 %v129, %v129
  %v146 = vpack.c.b16 %v130, %v130
  %v147 = vpack.c.b16 %v131, %v131
  %v148 = vpack.c.b16 %v132, %v132
  %v149 = vpack.c.b16 %v133, %v133
  %v150 = vpack.c.b16 %v134, %v134
  %v151 = vpack.c.b16 %v135, %v135
  %v152 = vpack.c.b16 %v136, %v136
  %v153 = vpack.c.b16 %v137, %v137
  %v154 = vpack.c.b16 %v138, %v138
  %v155 = vpack.c.b16 %v139, %v139
  %172 = vst [vmem:[%s3] sm:$0xf] %v140
  %173 = vst [vmem:[%s3 + $0x4] sm:$0xf] %v141
  %174 = vst [vmem:[%s3 + $0x8] sm:$0xf] %v142
  %175 = vst [vmem:[%s3 + $0xc] sm:$0xf] %v143
  %176 = vst [vmem:[%s3 + $0x10] sm:$0xf] %v144
  %177 = vst [vmem:[%s3 + $0x14] sm:$0xf] %v145
  %178 = vst [vmem:[%s3 + $0x18] sm:$0xf] %v146
  %179 = vst [vmem:[%s3 + $0x1c] sm:$0xf] %v147
  %180 = vst [vmem:[%s3 + $0x20] sm:$0xf] %v148
  %181 = vst [vmem:[%s3 + $0x24] sm:$0xf] %v149
  %182 = vst [vmem:[%s3 + $0x28] sm:$0xf] %v150
  %183 = vst [vmem:[%s3 + $0x2c] sm:$0xf] %v151
  %184 = vst [vmem:[%s3 + $0x30] sm:$0xf] %v152
  %185 = vst [vmem:[%s3 + $0x34] sm:$0xf] %v153
  %186 = vst [vmem:[%s3 + $0x38] sm:$0xf] %v154
  %187 = vst [vmem:[%s3 + $0x3c] sm:$0xf] %v155
  // Predicated region
  $region14: #{_lambda_.7} parent=0 // pred_check
    _
  $region15: #{_lambda_.7} parent=0 // pred_check_branch
    %189 = sbr.rel (0) target = $region17
  $region16: #{_lambda_.7} parent=0 // pred_region
    _
  $region17: #{_lambda_.7} parent=0 // pred_fallthru
    _
  // Predicated region
  $region18: #{_lambda_.7} parent=0 // pred_check
    _
  $region19: #{_lambda_.7} parent=0 // pred_check_branch
    %191 = sbr.rel (0) target = $region21
  $region20: #{_lambda_.7} parent=0 // pred_region
    _
  $region21: #{_lambda_.7} parent=0 // pred_fallthru
    _

// kernel: _lambda_.6
$region0: #{_lambda_.6}
  #allocation0 [shape = 'u32[]', space=smem, size = 0x4, offset = 0x4, fixed_abs, tag = 'smem constant byte address 0x4 - core index']
  #allocation1 [shape = 'u32[144,128]{1,0:T(1,128)}', space=vmem, size = 0x12000, scoped, tag = 'internal scratch']
  %s0 = inlined_call_operand.vmem [shape: bf16[128,128], index: 0, kind: input, shape index: {}]
  %s1 = inlined_call_operand.vmem [shape: bf16[128,128], index: 1, kind: input, shape index: {}]
  %s2 = inlined_call_operand.vmem [shape: bf16[128,128], index: 2, kind: output, shape index: {0}]
  %s3 = inlined_call_operand.vmem [shape: f32[8,128], index: 3, kind: output, shape index: {1}]
  %s4 = inlined_call_operand.vmem [shape: f32[8,128], index: 4, kind: output, shape index: {2}]
  %5 = xla_tuple %s2, %s3, %s4
  %s6 = sld [smem:[#allocation0]]
  $region34: #{_lambda_.6} parent=0
    _
  %s8 = ssub.s32 1, %s6
  %s9 = scalar_select 0, %s8, %s6
  // Predicated region
  $region2: #{_lambda_.6} parent=0 // pred_check
    _
  $region3: #{_lambda_.6} parent=0 // pred_check_branch
    %11 = sbr.rel (0) target = $region5
  $region4: #{_lambda_.6} parent=0 // pred_region
    _
  $region5: #{_lambda_.6} parent=0 // pred_fallthru
    _
  // Predicated region
  $region6: #{_lambda_.6} parent=0 // pred_check
    _
  $region7: #{_lambda_.6} parent=0 // pred_check_branch
    %13 = sbr.rel (0) target = $region9
  $region8: #{_lambda_.6} parent=0 // pred_region
    _
  $region9: #{_lambda_.6} parent=0 // pred_fallthru
    _
  %v15 = vld [vmem:[%s0] sm:$0xf]
  %v16 = vld [vmem:[%s0 + $0x4] sm:$0xf]
  %v17 = vld [vmem:[%s0 + $0x8] sm:$0xf]
  %v18 = vld [vmem:[%s0 + $0xc] sm:$0xf]
  %v19 = vld [vmem:[%s0 + $0x10] sm:$0xf]
  %v20 = vld [vmem:[%s0 + $0x14] sm:$0xf]
  %v21 = vld [vmem:[%s0 + $0x18] sm:$0xf]
  %v22 = vld [vmem:[%s0 + $0x1c] sm:$0xf]
  %v23 = vld [vmem:[%s0 + $0x20] sm:$0xf]
  %v24 = vld [vmem:[%s0 + $0x24] sm:$0xf]
  %v25 = vld [vmem:[%s0 + $0x28] sm:$0xf]
  %v26 = vld [vmem:[%s0 + $0x2c] sm:$0xf]
  %v27 = vld [vmem:[%s0 + $0x30] sm:$0xf]
  %v28 = vld [vmem:[%s0 + $0x34] sm:$0xf]
  %v29 = vld [vmem:[%s0 + $0x38] sm:$0xf]
  %v30 = vld [vmem:[%s0 + $0x3c] sm:$0xf]
  %v31 = vld [vmem:[%s1] sm:$0xf]
  %v32 = vld [vmem:[%s1 + $0x4] sm:$0xf]
  %v33 = vld [vmem:[%s1 + $0x8] sm:$0xf]
  %v34 = vld [vmem:[%s1 + $0xc] sm:$0xf]
  %v35 = vld [vmem:[%s1 + $0x10] sm:$0xf]
  %v36 = vld [vmem:[%s1 + $0x14] sm:$0xf]
  %v37 = vld [vmem:[%s1 + $0x18] sm:$0xf]
  %v38 = vld [vmem:[%s1 + $0x1c] sm:$0xf]
  %v39 = vld [vmem:[%s1 + $0x20] sm:$0xf]
  %v40 = vld [vmem:[%s1 + $0x24] sm:$0xf]
  %v41 = vld [vmem:[%s1 + $0x28] sm:$0xf]
  %v42 = vld [vmem:[%s1 + $0x2c] sm:$0xf]
  %v43 = vld [vmem:[%s1 + $0x30] sm:$0xf]
  %v44 = vld [vmem:[%s1 + $0x34] sm:$0xf]
  %v45 = vld [vmem:[%s1 + $0x38] sm:$0xf]
  %v46 = vld [vmem:[%s1 + $0x3c] sm:$0xf]
  %v63 = vunpack.c.l.b16 %v15
  %v64 = vunpack.c.l.b16 %v16
  %v65 = vunpack.c.l.b16 %v17
  %v66 = vunpack.c.l.b16 %v18
  %v67 = vunpack.c.l.b16 %v19
  %v68 = vunpack.c.l.b16 %v20
  %v69 = vunpack.c.l.b16 %v21
  %v70 = vunpack.c.l.b16 %v22
  %v71 = vunpack.c.l.b16 %v23
  %v72 = vunpack.c.l.b16 %v24
  %v73 = vunpack.c.l.b16 %v25
  %v74 = vunpack.c.l.b16 %v26
  %v75 = vunpack.c.l.b16 %v27
  %v76 = vunpack.c.l.b16 %v28
  %v77 = vunpack.c.l.b16 %v29
  %v78 = vunpack.c.l.b16 %v30
  %v79 = vpack.c.b16 %v64, %v63
  %v80 = vpack.c.b16 %v66, %v65
  %v81 = vpack.c.b16 %v68, %v67
  %v82 = vpack.c.b16 %v70, %v69
  %v83 = vpack.c.b16 %v72, %v71
  %v84 = vpack.c.b16 %v74, %v73
  %v85 = vpack.c.b16 %v76, %v75
  %v86 = vpack.c.b16 %v78, %v77
  %v111 = vunpack.c.l.b16 %v31
  %v112 = vunpack.c.l.b16 %v32
  %v113 = vunpack.c.l.b16 %v33
  %v114 = vunpack.c.l.b16 %v34
  %v115 = vunpack.c.l.b16 %v35
  %v116 = vunpack.c.l.b16 %v36
  %v117 = vunpack.c.l.b16 %v37
  %v118 = vunpack.c.l.b16 %v38
  %v119 = vunpack.c.l.b16 %v39
  %v120 = vunpack.c.l.b16 %v40
  %v121 = vunpack.c.l.b16 %v41
  %v122 = vunpack.c.l.b16 %v42
  %v123 = vunpack.c.l.b16 %v43
  %v124 = vunpack.c.l.b16 %v44
  %v125 = vunpack.c.l.b16 %v45
  %v126 = vunpack.c.l.b16 %v46
  %v127 = vpack.c.b16 %v112, %v111
  %v128 = vpack.c.b16 %v114, %v113
  %v129 = vpack.c.b16 %v116, %v115
  %v130 = vpack.c.b16 %v118, %v117
  %v131 = vpack.c.b16 %v120, %v119
  %v132 = vpack.c.b16 %v122, %v121
  %v133 = vpack.c.b16 %v124, %v123
  %v134 = vpack.c.b16 %v126, %v125
  %143 = vmatprep.subr.bf16.mxu0 0
  %144 = vmatpush1.bf16.msra.mxu0 %v127
  %145 = vmatprep.subr.bf16.mxu0 0
  %146 = vmatpush1.bf16.msra.mxu0 %v128
  %147 = vmatprep.subr.bf16.mxu0 0
  %148 = vmatpush1.bf16.msra.mxu0 %v129
  %149 = vmatprep.subr.bf16.mxu0 0
  %150 = vmatpush1.bf16.msra.mxu0 %v130
  %151 = vmatprep.subr.bf16.mxu0 0
  %152 = vmatpush1.bf16.msra.mxu0 %v131
  %153 = vmatprep.subr.bf16.mxu0 0
  %154 = vmatpush1.bf16.msra.mxu0 %v132
  %155 = vmatprep.subr.bf16.mxu0 0
  %156 = vmatpush1.bf16.msra.mxu0 %v133
  %157 = vmatprep.subr.bf16.mxu0 0
  %158 = vmatpush1.bf16.msra.mxu0 %v134
  %159 = vmatprep.subr.bf16.mxu0 0
  %160 = vmatpush1.bf16.msra.mxu0 0
  %161 = vmatprep.subr.bf16.mxu0 0
  %162 = vmatpush1.bf16.msra.mxu0 0
  %163 = vmatprep.subr.bf16.mxu0 0
  %164 = vmatpush1.bf16.msra.mxu0 0
  %165 = vmatprep.subr.bf16.mxu0 0
  %166 = vmatpush1.bf16.msra.mxu0 0
  %167 = vmatprep.subr.bf16.mxu0 0
  %168 = vmatpush1.bf16.msra.mxu0 0
  %169 = vmatprep.subr.bf16.mxu0 0
  %170 = vmatpush1.bf16.msra.mxu0 0
  %171 = vmatprep.subr.bf16.mxu0 0
  %172 = vmatpush1.bf16.msra.mxu0 0
  %173 = vmatprep.subr.bf16.mxu0 0
  %174 = vmatpush1.bf16.msra.mxu0 0
  %175 = vmatprep.mubr.bf16.mxu0 0
  %176 = vmatmul.mubr.bf16.gmra.mrb[0].mxu0 %v79
  %v177 = vpop.f32.mrb[0].mxu0
  %v178 = vadd.f32 0.0, %v177
  %v179 = vpop.f32.mrb[0].mxu0
  %v180 = vpop.f32.mrb[0].mxu0
  %v181 = vadd.f32 0.0, %v180
  %v182 = vpop.f32.mrb[0].mxu0
  %183 = vmatprep.mubr.bf16.mxu0 0
  %184 = vmatmul.mubr.bf16.gmra.mrb[0].mxu0 %v80
  %v185 = vpop.f32.mrb[0].mxu0
  %v186 = vadd.f32 0.0, %v185
  %v187 = vpop.f32.mrb[0].mxu0
  %v188 = vpop.f32.mrb[0].mxu0
  %v189 = vadd.f32 0.0, %v188
  %v190 = vpop.f32.mrb[0].mxu0
  %191 = vmatprep.mubr.bf16.mxu0 0
  %192 = vmatmul.mubr.bf16.gmra.mrb[0].mxu0 %v81
  %v193 = vpop.f32.mrb[0].mxu0
  %v194 = vadd.f32 0.0, %v193
  %v195 = vpop.f32.mrb[0].mxu0
  %v196 = vpop.f32.mrb[0].mxu0
  %v197 = vadd.f32 0.0, %v196
  %v198 = vpop.f32.mrb[0].mxu0
  %199 = vmatprep.mubr.bf16.mxu0 0
  %200 = vmatmul.mubr.bf16.gmra.mrb[0].mxu0 %v82
  %v201 = vpop.f32.mrb[0].mxu0
  %v202 = vadd.f32 0.0, %v201
  %v203 = vpop.f32.mrb[0].mxu0
  %v204 = vpop.f32.mrb[0].mxu0
  %v205 = vadd.f32 0.0, %v204
  %v206 = vpop.f32.mrb[0].mxu0
  %207 = vmatprep.mubr.bf16.mxu0 0
  %208 = vmatmul.mubr.bf16.gmra.mrb[0].mxu0 %v83
  %v209 = vpop.f32.mrb[0].mxu0
  %v210 = vadd.f32 0.0, %v209
  %v211 = vpop.f32.mrb[0].mxu0
  %v212 = vpop.f32.mrb[0].mxu0
  %v213 = vadd.f32 0.0, %v212
  %v214 = vpop.f32.mrb[0].mxu0
  %215 = vmatprep.mubr.bf16.mxu0 0
  %216 = vmatmul.mubr.bf16.gmra.mrb[0].mxu0 %v84
  %v217 = vpop.f32.mrb[0].mxu0
  %v218 = vadd.f32 0.0, %v217
  %v219 = vpop.f32.mrb[0].mxu0
  %v220 = vpop.f32.mrb[0].mxu0
  %v221 = vadd.f32 0.0, %v220
  %v222 = vpop.f32.mrb[0].mxu0
  %223 = vmatprep.mubr.bf16.mxu0 0
  %224 = vmatmul.mubr.bf16.gmra.mrb[0].mxu0 %v85
  %v225 = vpop.f32.mrb[0].mxu0
  %v226 = vadd.f32 0.0, %v225
  %v227 = vpop.f32.mrb[0].mxu0
  %v228 = vpop.f32.mrb[0].mxu0
  %v229 = vadd.f32 0.0, %v228
  %v230 = vpop.f32.mrb[0].mxu0
  %231 = vmatprep.mubr.bf16.mxu0 0
  %232 = vmatmul.mubr.bf16.gmra.mrb[0].mxu0 %v86
  %v233 = vpop.f32.mrb[0].mxu0
  %v234 = vadd.f32 0.0, %v233
  %v235 = vpop.f32.mrb[0].mxu0
  %v236 = vpop.f32.mrb[0].mxu0
  %v237 = vadd.f32 0.0, %v236
  %v238 = vpop.f32.mrb[0].mxu0
  %239 = vdwg.mxu0
  %v240 = vpack.c.bf16 %v181, %v178
  %v241 = vpack.c.bf16 %v189, %v186
  %v242 = vpack.c.bf16 %v197, %v194
  %v243 = vpack.c.bf16 %v205, %v202
  %v244 = vpack.c.bf16 %v213, %v210
  %v245 = vpack.c.bf16 %v221, %v218
  %v246 = vpack.c.bf16 %v229, %v226
  %v247 = vpack.c.bf16 %v237, %v234
  %v256 = vunpack.c.l.b16 %v240
  %v257 = vunpack.c.h.b16 %v240
  %v258 = vunpack.c.l.b16 %v241
  %v259 = vunpack.c.h.b16 %v241
  %v260 = vunpack.c.l.b16 %v242
  %v261 = vunpack.c.h.b16 %v242
  %v262 = vunpack.c.l.b16 %v243
  %v263 = vunpack.c.h.b16 %v243
  %v264 = vunpack.c.l.b16 %v244
  %v265 = vunpack.c.h.b16 %v244
  %v266 = vunpack.c.l.b16 %v245
  %v267 = vunpack.c.h.b16 %v245
  %v268 = vunpack.c.l.b16 %v246
  %v269 = vunpack.c.h.b16 %v246
  %v270 = vunpack.c.l.b16 %v247
  %v271 = vunpack.c.h.b16 %v247
  %v272 = vpack.c.b16 %v256, %v256
  %v273 = vpack.c.b16 %v257, %v257
  %v274 = vpack.c.b16 %v258, %v258
  %v275 = vpack.c.b16 %v259, %v259
  %v276 = vpack.c.b16 %v260, %v260
  %v277 = vpack.c.b16 %v261, %v261
  %v278 = vpack.c.b16 %v262, %v262
  %v279 = vpack.c.b16 %v263, %v263
  %v280 = vpack.c.b16 %v264, %v264
  %v281 = vpack.c.b16 %v265, %v265
  %v282 = vpack.c.b16 %v266, %v266
  %v283 = vpack.c.b16 %v267, %v267
  %v284 = vpack.c.b16 %v268, %v268
  %v285 = vpack.c.b16 %v269, %v269
  %v286 = vpack.c.b16 %v270, %v270
  %v287 = vpack.c.b16 %v271, %v271
  %304 = vst [vmem:[%s2] sm:$0xf] %v272
  %305 = vst [vmem:[%s2 + $0x4] sm:$0xf] %v273
  %306 = vst [vmem:[%s2 + $0x8] sm:$0xf] %v274
  %307 = vst [vmem:[%s2 + $0xc] sm:$0xf] %v275
  %308 = vst [vmem:[%s2 + $0x10] sm:$0xf] %v276
  %309 = vst [vmem:[%s2 + $0x14] sm:$0xf] %v277
  %310 = vst [vmem:[%s2 + $0x18] sm:$0xf] %v278
  %311 = vst [vmem:[%s2 + $0x1c] sm:$0xf] %v279
  %312 = vst [vmem:[%s2 + $0x20] sm:$0xf] %v280
  %313 = vst [vmem:[%s2 + $0x24] sm:$0xf] %v281
  %314 = vst [vmem:[%s2 + $0x28] sm:$0xf] %v282
  %315 = vst [vmem:[%s2 + $0x2c] sm:$0xf] %v283
  %316 = vst [vmem:[%s2 + $0x30] sm:$0xf] %v284
  %317 = vst [vmem:[%s2 + $0x34] sm:$0xf] %v285
  %318 = vst [vmem:[%s2 + $0x38] sm:$0xf] %v286
  %319 = vst [vmem:[%s2 + $0x3c] sm:$0xf] %v287
  %v320 = vadd.f32 %v178, %v181
  %v321 = vadd.f32 %v320, %v186
  %v322 = vadd.f32 %v321, %v189
  %v323 = vadd.f32 %v322, %v194
  %v324 = vadd.f32 %v323, %v197
  %v325 = vadd.f32 %v324, %v202
  %v326 = vadd.f32 %v325, %v205
  %v327 = vadd.f32 %v326, %v210
  %v328 = vadd.f32 %v327, %v213
  %v329 = vadd.f32 %v328, %v218
  %v330 = vadd.f32 %v329, %v221
  %v331 = vadd.f32 %v330, %v226
  %v332 = vadd.f32 %v331, %v229
  %v333 = vadd.f32 %v332, %v234
  %v334 = vadd.f32 %v333, %v237
  %335 = vst [vmem:[%s3] sm:$0xff] %v334
  %v336 = vmul.f32 %v178, %v178
  %v337 = vmul.f32 %v181, %v181
  %v338 = vmul.f32 %v186, %v186
  %v339 = vmul.f32 %v189, %v189
  %v340 = vmul.f32 %v194, %v194
  %v341 = vmul.f32 %v197, %v197
  %v342 = vmul.f32 %v202, %v202
  %v343 = vmul.f32 %v205, %v205
  %v344 = vmul.f32 %v210, %v210
  %v345 = vmul.f32 %v213, %v213
  %v346 = vmul.f32 %v218, %v218
  %v347 = vmul.f32 %v221, %v221
  %v348 = vmul.f32 %v226, %v226
  %v349 = vmul.f32 %v229, %v229
  %v350 = vmul.f32 %v234, %v234
  %v351 = vmul.f32 %v237, %v237
  %v352 = vadd.f32 %v336, %v337
  %v353 = vadd.f32 %v352, %v338
  %v354 = vadd.f32 %v353, %v339
  %v355 = vadd.f32 %v354, %v340
  %v356 = vadd.f32 %v355, %v341
  %v357 = vadd.f32 %v356, %v342
  %v358 = vadd.f32 %v357, %v343
  %v359 = vadd.f32 %v358, %v344
  %v360 = vadd.f32 %v359, %v345
  %v361 = vadd.f32 %v360, %v346
  %v362 = vadd.f32 %v361, %v347
  %v363 = vadd.f32 %v362, %v348
  %v364 = vadd.f32 %v363, %v349
  %v365 = vadd.f32 %v364, %v350
  %v366 = vadd.f32 %v365, %v351
  %367 = vst [vmem:[%s4] sm:$0xff] %v366
  // Predicated region
  $region10: #{_lambda_.6} parent=0 // pred_check
    _
  $region11: #{_lambda_.6} parent=0 // pred_check_branch
    %369 = sbr.rel (0) target = $region13
  $region12: #{_lambda_.6} parent=0 // pred_region
    _
  $region13: #{_lambda_.6} parent=0 // pred_fallthru
    _
  // Predicated region
  $region14: #{_lambda_.6} parent=0 // pred_check
    _
  $region15: #{_lambda_.6} parent=0 // pred_check_branch
    %371 = sbr.rel (0) target = $region17
  $region16: #{_lambda_.6} parent=0 // pred_region
    _
  $region17: #{_lambda_.6} parent=0 // pred_fallthru
    _
  // Predicated region
  $region18: #{_lambda_.6} parent=0 // pred_check
    _
  $region19: #{_lambda_.6} parent=0 // pred_check_branch
    %373 = sbr.rel (0) target = $region21
  $region20: #{_lambda_.6} parent=0 // pred_region
    _
  $region21: #{_lambda_.6} parent=0 // pred_fallthru
    _
  // Predicated region
  $region22: #{_lambda_.6} parent=0 // pred_check
    _
  $region23: #{_lambda_.6} parent=0 // pred_check_branch
    %375 = sbr.rel (0) target = $region25
  $region24: #{_lambda_.6} parent=0 // pred_region
    _
  $region25: #{_lambda_.6} parent=0 // pred_fallthru
    _
  // Predicated region
  $region26: #{_lambda_.6} parent=0 // pred_check
    _
  $region27: #{_lambda_.6} parent=0 // pred_check_branch
    %377 = sbr.rel (0) target = $region29
  $region28: #{_lambda_.6} parent=0 // pred_region
    _
  $region29: #{_lambda_.6} parent=0 // pred_fallthru
    _
  // Predicated region
  $region30: #{_lambda_.6} parent=0 // pred_check
    _
  $region31: #{_lambda_.6} parent=0 // pred_check_branch
    %379 = sbr.rel (0) target = $region33
  $region32: #{_lambda_.6} parent=0 // pred_region
    _
  $region33: #{_lambda_.6} parent=0 // pred_fallthru
    _

// kernel: _lambda_.9
$region0: #{_lambda_.9}
  #allocation0 [shape = 'u32[]', space=smem, size = 0x4, offset = 0x4, fixed_abs, tag = 'smem constant byte address 0x4 - core index']
  #allocation1 [shape = 'u32[144,128]{1,0:T(1,128)}', space=vmem, size = 0x12000, scoped, tag = 'internal scratch']
  %s0 = inlined_call_operand.vmem [shape: bf16[128,128], index: 0, kind: input, shape index: {}]
  %s1 = inlined_call_operand.vmem [shape: f32[1,128], index: 1, kind: input, shape index: {}]
  %s2 = inlined_call_operand.vmem [shape: f32[1,128], index: 2, kind: input, shape index: {}]
  %s3 = inlined_call_operand.vmem [shape: bf16[128,128], index: 3, kind: output, shape index: {}]
  %s4 = sld [smem:[#allocation0]]
  $region22: #{_lambda_.9} parent=0
    _
  %s6 = ssub.s32 1, %s4
  %s7 = scalar_select 0, %s6, %s4
  // Predicated region
  $region2: #{_lambda_.9} parent=0 // pred_check
    _
  $region3: #{_lambda_.9} parent=0 // pred_check_branch
    %9 = sbr.rel (0) target = $region5
  $region4: #{_lambda_.9} parent=0 // pred_region
    _
  $region5: #{_lambda_.9} parent=0 // pred_fallthru
    _
  // Predicated region
  $region6: #{_lambda_.9} parent=0 // pred_check
    _
  $region7: #{_lambda_.9} parent=0 // pred_check_branch
    %11 = sbr.rel (0) target = $region9
  $region8: #{_lambda_.9} parent=0 // pred_region
    _
  $region9: #{_lambda_.9} parent=0 // pred_fallthru
    _
  // Predicated region
  $region10: #{_lambda_.9} parent=0 // pred_check
    _
  $region11: #{_lambda_.9} parent=0 // pred_check_branch
    %13 = sbr.rel (0) target = $region13
  $region12: #{_lambda_.9} parent=0 // pred_region
    _
  $region13: #{_lambda_.9} parent=0 // pred_fallthru
    _
  %v14 = vld [vmem:[%s0] sm:$0xf]
  %v15 = vld [vmem:[%s0 + $0x4] sm:$0xf]
  %v16 = vld [vmem:[%s0 + $0x8] sm:$0xf]
  %v17 = vld [vmem:[%s0 + $0xc] sm:$0xf]
  %v18 = vld [vmem:[%s0 + $0x10] sm:$0xf]
  %v19 = vld [vmem:[%s0 + $0x14] sm:$0xf]
  %v20 = vld [vmem:[%s0 + $0x18] sm:$0xf]
  %v21 = vld [vmem:[%s0 + $0x1c] sm:$0xf]
  %v22 = vld [vmem:[%s0 + $0x20] sm:$0xf]
  %v23 = vld [vmem:[%s0 + $0x24] sm:$0xf]
  %v24 = vld [vmem:[%s0 + $0x28] sm:$0xf]
  %v25 = vld [vmem:[%s0 + $0x2c] sm:$0xf]
  %v26 = vld [vmem:[%s0 + $0x30] sm:$0xf]
  %v27 = vld [vmem:[%s0 + $0x34] sm:$0xf]
  %v28 = vld [vmem:[%s0 + $0x38] sm:$0xf]
  %v29 = vld [vmem:[%s0 + $0x3c] sm:$0xf]
  %v30 = vunpack.c.l.bf16 %v14
  %v31 = vunpack.c.l.bf16 %v15
  %v32 = vunpack.c.l.bf16 %v16
  %v33 = vunpack.c.l.bf16 %v17
  %v34 = vunpack.c.l.bf16 %v18
  %v35 = vunpack.c.l.bf16 %v19
  %v36 = vunpack.c.l.bf16 %v20
  %v37 = vunpack.c.l.bf16 %v21
  %v38 = vunpack.c.l.bf16 %v22
  %v39 = vunpack.c.l.bf16 %v23
  %v40 = vunpack.c.l.bf16 %v24
  %v41 = vunpack.c.l.bf16 %v25
  %v42 = vunpack.c.l.bf16 %v26
  %v43 = vunpack.c.l.bf16 %v27
  %v44 = vunpack.c.l.bf16 %v28
  %v45 = vunpack.c.l.bf16 %v29
  %v46 = vld [vmem:[%s1] sm:$0x1]
  %v48 = vlaneseq
  %v49 = vshrl.u32 %v48, 7
  %v50 = vsub.s32 0, %v49
  %v51 = vrot.slane %v46, %v50
  %v53 = vmul.f32 %v30, %v51
  %v54 = vmul.f32 %v31, %v51
  %v55 = vmul.f32 %v32, %v51
  %v56 = vmul.f32 %v33, %v51
  %v57 = vmul.f32 %v34, %v51
  %v58 = vmul.f32 %v35, %v51
  %v59 = vmul.f32 %v36, %v51
  %v60 = vmul.f32 %v37, %v51
  %v61 = vmul.f32 %v38, %v51
  %v62 = vmul.f32 %v39, %v51
  %v63 = vmul.f32 %v40, %v51
  %v64 = vmul.f32 %v41, %v51
  %v65 = vmul.f32 %v42, %v51
  %v66 = vmul.f32 %v43, %v51
  %v67 = vmul.f32 %v44, %v51
  %v68 = vmul.f32 %v45, %v51
  %v69 = vld [vmem:[%s2] sm:$0x1]
  %v71 = vlaneseq
  %v72 = vshrl.u32 %v71, 7
  %v73 = vsub.s32 0, %v72
  %v74 = vrot.slane %v69, %v73
  %v76 = vadd.f32 %v53, %v74
  %v77 = vadd.f32 %v54, %v74
  %v78 = vadd.f32 %v55, %v74
  %v79 = vadd.f32 %v56, %v74
  %v80 = vadd.f32 %v57, %v74
  %v81 = vadd.f32 %v58, %v74
  %v82 = vadd.f32 %v59, %v74
  %v83 = vadd.f32 %v60, %v74
  %v84 = vadd.f32 %v61, %v74
  %v85 = vadd.f32 %v62, %v74
  %v86 = vadd.f32 %v63, %v74
  %v87 = vadd.f32 %v64, %v74
  %v88 = vadd.f32 %v65, %v74
  %v89 = vadd.f32 %v66, %v74
  %v90 = vadd.f32 %v67, %v74
  %v91 = vadd.f32 %v68, %v74
  %v92 = vpack.c.bf16 %v77, %v76
  %v93 = vpack.c.bf16 %v79, %v78
  %v94 = vpack.c.bf16 %v81, %v80
  %v95 = vpack.c.bf16 %v83, %v82
  %v96 = vpack.c.bf16 %v85, %v84
  %v97 = vpack.c.bf16 %v87, %v86
  %v98 = vpack.c.bf16 %v89, %v88
  %v99 = vpack.c.bf16 %v91, %v90
  %v108 = vunpack.c.l.b16 %v92
  %v109 = vunpack.c.h.b16 %v92
  %v110 = vunpack.c.l.b16 %v93
  %v111 = vunpack.c.h.b16 %v93
  %v112 = vunpack.c.l.b16 %v94
  %v113 = vunpack.c.h.b16 %v94
  %v114 = vunpack.c.l.b16 %v95
  %v115 = vunpack.c.h.b16 %v95
  %v116 = vunpack.c.l.b16 %v96
  %v117 = vunpack.c.h.b16 %v96
  %v118 = vunpack.c.l.b16 %v97
  %v119 = vunpack.c.h.b16 %v97
  %v120 = vunpack.c.l.b16 %v98
  %v121 = vunpack.c.h.b16 %v98
  %v122 = vunpack.c.l.b16 %v99
  %v123 = vunpack.c.h.b16 %v99
  %v124 = vpack.c.b16 %v108, %v108
  %v125 = vpack.c.b16 %v109, %v109
  %v126 = vpack.c.b16 %v110, %v110
  %v127 = vpack.c.b16 %v111, %v111
  %v128 = vpack.c.b16 %v112, %v112
  %v129 = vpack.c.b16 %v113, %v113
  %v130 = vpack.c.b16 %v114, %v114
  %v131 = vpack.c.b16 %v115, %v115
  %v132 = vpack.c.b16 %v116, %v116
  %v133 = vpack.c.b16 %v117, %v117
  %v134 = vpack.c.b16 %v118, %v118
  %v135 = vpack.c.b16 %v119, %v119
  %v136 = vpack.c.b16 %v120, %v120
  %v137 = vpack.c.b16 %v121, %v121
  %v138 = vpack.c.b16 %v122, %v122
  %v139 = vpack.c.b16 %v123, %v123
  %156 = vst [vmem:[%s3] sm:$0xf] %v124
  %157 = vst [vmem:[%s3 + $0x4] sm:$0xf] %v125
  %158 = vst [vmem:[%s3 + $0x8] sm:$0xf] %v126
  %159 = vst [vmem:[%s3 + $0xc] sm:$0xf] %v127
  %160 = vst [vmem:[%s3 + $0x10] sm:$0xf] %v128
  %161 = vst [vmem:[%s3 + $0x14] sm:$0xf] %v129
  %162 = vst [vmem:[%s3 + $0x18] sm:$0xf] %v130
  %163 = vst [vmem:[%s3 + $0x1c] sm:$0xf] %v131
  %164 = vst [vmem:[%s3 + $0x20] sm:$0xf] %v132
  %165 = vst [vmem:[%s3 + $0x24] sm:$0xf] %v133
  %166 = vst [vmem:[%s3 + $0x28] sm:$0xf] %v134
  %167 = vst [vmem:[%s3 + $0x2c] sm:$0xf] %v135
  %168 = vst [vmem:[%s3 + $0x30] sm:$0xf] %v136
  %169 = vst [vmem:[%s3 + $0x34] sm:$0xf] %v137
  %170 = vst [vmem:[%s3 + $0x38] sm:$0xf] %v138
  %171 = vst [vmem:[%s3 + $0x3c] sm:$0xf] %v139
  // Predicated region
  $region14: #{_lambda_.9} parent=0 // pred_check
    _
  $region15: #{_lambda_.9} parent=0 // pred_check_branch
    %173 = sbr.rel (0) target = $region17
  $region16: #{_lambda_.9} parent=0 // pred_region
    _
  $region17: #{_lambda_.9} parent=0 // pred_fallthru
    _
  // Predicated region
  $region18: #{_lambda_.9} parent=0 // pred_check
    _
  $region19: #{_lambda_.9} parent=0 // pred_check_branch
    %175 = sbr.rel (0) target = $region21
  $region20: #{_lambda_.9} parent=0 // pred_region
    _
  $region21: #{_lambda_.9} parent=0 // pred_fallthru
    _

// kernel: _lambda_.11
$region0: #{_lambda_.11}
  #allocation0 [shape = 'u32[]', space=smem, size = 0x4, offset = 0x4, fixed_abs, tag = 'smem constant byte address 0x4 - core index']
  #allocation1 [shape = 'u32[144,128]{1,0:T(1,128)}', space=vmem, size = 0x12000, scoped, tag = 'internal scratch']
  %s0 = inlined_call_operand.vmem [shape: bf16[128,128], index: 0, kind: input, shape index: {}]
  %s1 = inlined_call_operand.vmem [shape: f32[1,128], index: 1, kind: input, shape index: {}]
  %s2 = inlined_call_operand.vmem [shape: f32[1,128], index: 2, kind: input, shape index: {}]
  %s3 = inlined_call_operand.vmem [shape: bf16[128,128], index: 3, kind: input, shape index: {}]
  %s4 = inlined_call_operand.vmem [shape: f32[128,128], index: 4, kind: output, shape index: {}]
  %s5 = sld [smem:[#allocation0]]
  $region26: #{_lambda_.11} parent=0
    _
  %s7 = ssub.s32 1, %s5
  %s8 = scalar_select 0, %s7, %s5
  // Predicated region
  $region2: #{_lambda_.11} parent=0 // pred_check
    _
  $region3: #{_lambda_.11} parent=0 // pred_check_branch
    %10 = sbr.rel (0) target = $region5
  $region4: #{_lambda_.11} parent=0 // pred_region
    _
  $region5: #{_lambda_.11} parent=0 // pred_fallthru
    _
  // Predicated region
  $region6: #{_lambda_.11} parent=0 // pred_check
    _
  $region7: #{_lambda_.11} parent=0 // pred_check_branch
    %12 = sbr.rel (0) target = $region9
  $region8: #{_lambda_.11} parent=0 // pred_region
    _
  $region9: #{_lambda_.11} parent=0 // pred_fallthru
    _
  // Predicated region
  $region10: #{_lambda_.11} parent=0 // pred_check
    _
  $region11: #{_lambda_.11} parent=0 // pred_check_branch
    %14 = sbr.rel (0) target = $region13
  $region12: #{_lambda_.11} parent=0 // pred_region
    _
  $region13: #{_lambda_.11} parent=0 // pred_fallthru
    _
  // Predicated region
  $region14: #{_lambda_.11} parent=0 // pred_check
    _
  $region15: #{_lambda_.11} parent=0 // pred_check_branch
    %16 = sbr.rel (0) target = $region17
  $region16: #{_lambda_.11} parent=0 // pred_region
    _
  $region17: #{_lambda_.11} parent=0 // pred_fallthru
    _
  %v17 = vld [vmem:[%s0] sm:$0xf]
  %v18 = vld [vmem:[%s0 + $0x4] sm:$0xf]
  %v19 = vld [vmem:[%s0 + $0x8] sm:$0xf]
  %v20 = vld [vmem:[%s0 + $0xc] sm:$0xf]
  %v21 = vld [vmem:[%s0 + $0x10] sm:$0xf]
  %v22 = vld [vmem:[%s0 + $0x14] sm:$0xf]
  %v23 = vld [vmem:[%s0 + $0x18] sm:$0xf]
  %v24 = vld [vmem:[%s0 + $0x1c] sm:$0xf]
  %v25 = vld [vmem:[%s0 + $0x20] sm:$0xf]
  %v26 = vld [vmem:[%s0 + $0x24] sm:$0xf]
  %v27 = vld [vmem:[%s0 + $0x28] sm:$0xf]
  %v28 = vld [vmem:[%s0 + $0x2c] sm:$0xf]
  %v29 = vld [vmem:[%s0 + $0x30] sm:$0xf]
  %v30 = vld [vmem:[%s0 + $0x34] sm:$0xf]
  %v31 = vld [vmem:[%s0 + $0x38] sm:$0xf]
  %v32 = vld [vmem:[%s0 + $0x3c] sm:$0xf]
  %v33 = vunpack.c.l.bf16 %v17
  %v34 = vunpack.c.l.bf16 %v18
  %v35 = vunpack.c.l.bf16 %v19
  %v36 = vunpack.c.l.bf16 %v20
  %v37 = vunpack.c.l.bf16 %v21
  %v38 = vunpack.c.l.bf16 %v22
  %v39 = vunpack.c.l.bf16 %v23
  %v40 = vunpack.c.l.bf16 %v24
  %v41 = vunpack.c.l.bf16 %v25
  %v42 = vunpack.c.l.bf16 %v26
  %v43 = vunpack.c.l.bf16 %v27
  %v44 = vunpack.c.l.bf16 %v28
  %v45 = vunpack.c.l.bf16 %v29
  %v46 = vunpack.c.l.bf16 %v30
  %v47 = vunpack.c.l.bf16 %v31
  %v48 = vunpack.c.l.bf16 %v32
  %v49 = vld [vmem:[%s1] sm:$0x1]
  %v51 = vlaneseq
  %v52 = vshrl.u32 %v51, 7
  %v53 = vsub.s32 0, %v52
  %v54 = vrot.slane %v49, %v53
  %v56 = vmul.f32 %v33, %v54
  %v57 = vmul.f32 %v34, %v54
  %v58 = vmul.f32 %v35, %v54
  %v59 = vmul.f32 %v36, %v54
  %v60 = vmul.f32 %v37, %v54
  %v61 = vmul.f32 %v38, %v54
  %v62 = vmul.f32 %v39, %v54
  %v63 = vmul.f32 %v40, %v54
  %v64 = vmul.f32 %v41, %v54
  %v65 = vmul.f32 %v42, %v54
  %v66 = vmul.f32 %v43, %v54
  %v67 = vmul.f32 %v44, %v54
  %v68 = vmul.f32 %v45, %v54
  %v69 = vmul.f32 %v46, %v54
  %v70 = vmul.f32 %v47, %v54
  %v71 = vmul.f32 %v48, %v54
  %v72 = vld [vmem:[%s2] sm:$0x1]
  %v74 = vlaneseq
  %v75 = vshrl.u32 %v74, 7
  %v76 = vsub.s32 0, %v75
  %v77 = vrot.slane %v72, %v76
  %v79 = vadd.f32 %v56, %v77
  %v80 = vadd.f32 %v57, %v77
  %v81 = vadd.f32 %v58, %v77
  %v82 = vadd.f32 %v59, %v77
  %v83 = vadd.f32 %v60, %v77
  %v84 = vadd.f32 %v61, %v77
  %v85 = vadd.f32 %v62, %v77
  %v86 = vadd.f32 %v63, %v77
  %v87 = vadd.f32 %v64, %v77
  %v88 = vadd.f32 %v65, %v77
  %v89 = vadd.f32 %v66, %v77
  %v90 = vadd.f32 %v67, %v77
  %v91 = vadd.f32 %v68, %v77
  %v92 = vadd.f32 %v69, %v77
  %v93 = vadd.f32 %v70, %v77
  %v94 = vadd.f32 %v71, %v77
  %v95 = vld [vmem:[%s3] sm:$0xf]
  %v96 = vld [vmem:[%s3 + $0x4] sm:$0xf]
  %v97 = vld [vmem:[%s3 + $0x8] sm:$0xf]
  %v98 = vld [vmem:[%s3 + $0xc] sm:$0xf]
  %v99 = vld [vmem:[%s3 + $0x10] sm:$0xf]
  %v100 = vld [vmem:[%s3 + $0x14] sm:$0xf]
  %v101 = vld [vmem:[%s3 + $0x18] sm:$0xf]
  %v102 = vld [vmem:[%s3 + $0x1c] sm:$0xf]
  %v103 = vld [vmem:[%s3 + $0x20] sm:$0xf]
  %v104 = vld [vmem:[%s3 + $0x24] sm:$0xf]
  %v105 = vld [vmem:[%s3 + $0x28] sm:$0xf]
  %v106 = vld [vmem:[%s3 + $0x2c] sm:$0xf]
  %v107 = vld [vmem:[%s3 + $0x30] sm:$0xf]
  %v108 = vld [vmem:[%s3 + $0x34] sm:$0xf]
  %v109 = vld [vmem:[%s3 + $0x38] sm:$0xf]
  %v110 = vld [vmem:[%s3 + $0x3c] sm:$0xf]
  %v111 = vunpack.c.l.bf16 %v95
  %v112 = vunpack.c.l.bf16 %v96
  %v113 = vunpack.c.l.bf16 %v97
  %v114 = vunpack.c.l.bf16 %v98
  %v115 = vunpack.c.l.bf16 %v99
  %v116 = vunpack.c.l.bf16 %v100
  %v117 = vunpack.c.l.bf16 %v101
  %v118 = vunpack.c.l.bf16 %v102
  %v119 = vunpack.c.l.bf16 %v103
  %v120 = vunpack.c.l.bf16 %v104
  %v121 = vunpack.c.l.bf16 %v105
  %v122 = vunpack.c.l.bf16 %v106
  %v123 = vunpack.c.l.bf16 %v107
  %v124 = vunpack.c.l.bf16 %v108
  %v125 = vunpack.c.l.bf16 %v109
  %v126 = vunpack.c.l.bf16 %v110
  %v127 = vadd.f32 %v79, %v111
  %v128 = vadd.f32 %v80, %v112
  %v129 = vadd.f32 %v81, %v113
  %v130 = vadd.f32 %v82, %v114
  %v131 = vadd.f32 %v83, %v115
  %v132 = vadd.f32 %v84, %v116
  %v133 = vadd.f32 %v85, %v117
  %v134 = vadd.f32 %v86, %v118
  %v135 = vadd.f32 %v87, %v119
  %v136 = vadd.f32 %v88, %v120
  %v137 = vadd.f32 %v89, %v121
  %v138 = vadd.f32 %v90, %v122
  %v139 = vadd.f32 %v91, %v123
  %v140 = vadd.f32 %v92, %v124
  %v141 = vadd.f32 %v93, %v125
  %v142 = vadd.f32 %v94, %v126
  %v143 = vmax.f32 %v127, 0.0
  %v144 = vmax.f32 %v128, 0.0
  %v145 = vmax.f32 %v129, 0.0
  %v146 = vmax.f32 %v130, 0.0
  %v147 = vmax.f32 %v131, 0.0
  %v148 = vmax.f32 %v132, 0.0
  %v149 = vmax.f32 %v133, 0.0
  %v150 = vmax.f32 %v134, 0.0
  %v151 = vmax.f32 %v135, 0.0
  %v152 = vmax.f32 %v136, 0.0
  %v153 = vmax.f32 %v137, 0.0
  %v154 = vmax.f32 %v138, 0.0
  %v155 = vmax.f32 %v139, 0.0
  %v156 = vmax.f32 %v140, 0.0
  %v157 = vmax.f32 %v141, 0.0
  %v158 = vmax.f32 %v142, 0.0
  %159 = vst [vmem:[%s4] sm:$0xff] %v143
  %160 = vst [vmem:[%s4 + $0x8] sm:$0xff] %v144
  %161 = vst [vmem:[%s4 + $0x10] sm:$0xff] %v145
  %162 = vst [vmem:[%s4 + $0x18] sm:$0xff] %v146
  %163 = vst [vmem:[%s4 + $0x20] sm:$0xff] %v147
  %164 = vst [vmem:[%s4 + $0x28] sm:$0xff] %v148
  %165 = vst [vmem:[%s4 + $0x30] sm:$0xff] %v149
  %166 = vst [vmem:[%s4 + $0x38] sm:$0xff] %v150
  %167 = vst [vmem:[%s4 + $0x40] sm:$0xff] %v151
  %168 = vst [vmem:[%s4 + $0x48] sm:$0xff] %v152
  %169 = vst [vmem:[%s4 + $0x50] sm:$0xff] %v153
  %170 = vst [vmem:[%s4 + $0x58] sm:$0xff] %v154
  %171 = vst [vmem:[%s4 + $0x60] sm:$0xff] %v155
  %172 = vst [vmem:[%s4 + $0x68] sm:$0xff] %v156
  %173 = vst [vmem:[%s4 + $0x70] sm:$0xff] %v157
  %174 = vst [vmem:[%s4 + $0x78] sm:$0xff] %v158
  // Predicated region
  $region18: #{_lambda_.11} parent=0 // pred_check
    _
  $region19: #{_lambda_.11} parent=0 // pred_check_branch
    %176 = sbr.rel (0) target = $region21
  $region20: #{_lambda_.11} parent=0 // pred_region
    _
  $region21: #{_lambda_.11} parent=0 // pred_fallthru
    _
  // Predicated region
  $region22: #{_lambda_.11} parent=0 // pred_check
    _
  $region23: #{_lambda_.11} parent=0 // pred_check_branch
    %178 = sbr.rel (0) target = $region25
  $region24: #{_lambda_.11} parent=0 // pred_region
    _
  $region25: #{_lambda_.11} parent=0 // pred_fallthru
    _

</llo_original>
